<compile_context>
chip_gen: v5e
topology: v5e:2x2
jax: 0.10.0
libtpu: 0.0.40
codegen_flags: <defaults>
</compile_context>

<pallas_src>
import jax
import jax.numpy as jnp
from jax.experimental import pallas as pl
from jax.experimental.pallas import tpu as pltpu


def _cdiv(a, b):
    return -(-a // b)


def _round_up(x, m):
    return _cdiv(x, m) * m


def _ff_bellman_kernel(x_ref, w1_ref, b1_ref, w2_ref, b2_ref, w3_ref, b3_ref,
                       out_ref):
    """Fused 3-layer MLP on one batch tile.

    x_ref   : (TB, input_dim)  batch-major, streamed straight from HBM
    wN_ref  : (out_f, in_f)    VMEM-resident for the whole grid (bf16 or f32)
    bN_ref  : (out_f, 1)       f32
    out_ref : (n_actions, TB)  feature-major (batch on the 128-lane axis)
    """
    w_dtype = w1_ref.dtype                      # bf16 (default) or f32
    x = x_ref[...]
    b1 = b1_ref[...]
    b2 = b2_ref[...]
    b3 = b3_ref[...]

    # Layer 1: contract input_dim of both operands -> feature-major (h1, TB),
    # no wrapper transpose needed.
    h1 = jax.lax.dot_general(
        w1_ref[...], x.astype(w_dtype),
        dimension_numbers=(((1,), (1,)), ((), ())),
        preferred_element_type=jnp.float32)
    h1 = jnp.maximum(h1 + b1, 0.0)              # f32 bias add + ReLU (VPU)

    # Layer 2: Linear + ReLU.
    h2 = jnp.dot(w2_ref[...], h1.astype(w_dtype),
                 preferred_element_type=jnp.float32)
    h2 = jnp.maximum(h2 + b2, 0.0)

    # Layer 3: Linear (no activation).
    q = jnp.dot(w3_ref[...], h2.astype(w_dtype),
                preferred_element_type=jnp.float32)
    out_ref[...] = (q + b3).astype(out_ref.dtype)


def ff_bellman_values(state, w1, b1, w2, b2, w3, b3, *,
                      block_batch=8192, mxu_bf16=True):
    """Forward pass of FFBellmanValues.

    state: (B, input_dim) f32
    w1: (input_dim, hidden1), b1: (hidden1,)
    w2: (hidden1, hidden2),   b2: (hidden2,)
    w3: (hidden2, n_actions), b3: (n_actions,)
    returns: (B, n_actions) f32
    """
    B, input_dim = state.shape
    hidden1 = w1.shape[1]
    hidden2 = w2.shape[1]
    n_actions = w3.shape[1]

    # Batch tiling: lane-aligned (128) tiles, no explicit padding (partial edge
    # blocks handle the tail), at least 2 grid steps for large batches so v7x
    # can split the parallel axis across its two TensorCores.
    if B <= 256:
        TB = B                                   # one block, zero waste
    else:
        num_steps = max(2, _cdiv(B, block_batch))
        TB = _round_up(_cdiv(B, num_steps), 128)
    grid = (_cdiv(B, TB),)

    # Weights feature-major (out, in); cast once for the MXU. Biases stay f32.
    w_dtype = jnp.bfloat16 if mxu_bf16 else jnp.float32
    w1t = w1.T.astype(w_dtype)                   # (hidden1, input_dim)
    w2t = w2.T.astype(w_dtype)                   # (hidden2, hidden1)
    w3t = w3.T.astype(w_dtype)                   # (n_actions, hidden2)
    b1c = b1.astype(jnp.float32).reshape(hidden1, 1)
    b2c = b2.astype(jnp.float32).reshape(hidden2, 1)
    b3c = b3.astype(jnp.float32).reshape(n_actions, 1)

    def resident(a):                             # same block every grid step
        return pl.BlockSpec(a.shape, lambda i: (0, 0))

    flops = 2 * B * (input_dim * hidden1 + hidden1 * hidden2
                     + hidden2 * n_actions)
    w_itemsize = 2 if mxu_bf16 else 4
    bytes_accessed = (state.size * 4 + B * n_actions * 4
                      + (w1t.size + w2t.size + w3t.size) * w_itemsize
                      + (b1.size + b2.size + b3.size) * 4)

    out_t = pl.pallas_call(
        _ff_bellman_kernel,
        out_shape=jax.ShapeDtypeStruct((n_actions, B), jnp.float32),
        grid=grid,
        in_specs=[
            pl.BlockSpec((TB, input_dim), lambda i: (i, 0)),  # streamed state
            resident(w1t), resident(b1c),
            resident(w2t), resident(b2c),
            resident(w3t), resident(b3c),
        ],
        out_specs=pl.BlockSpec((n_actions, TB), lambda i: (0, i)),
        compiler_params=pltpu.CompilerParams(
            dimension_semantics=("parallel",)),
        cost_estimate=pl.CostEstimate(
            flops=int(flops), transcendentals=0,
            bytes_accessed=int(bytes_accessed)),
    )(state, w1t, b1c, w2t, b2c, w3t, b3c)

    # (n_actions, B) -> (B, n_actions). The output is the small tensor
    # (4*B f32), so this final relayout is minor next to the kernel's own
    # HBM traffic.
    return out_t.T


def _reference(state, w1, b1, w2, b2, w3, b3, op_dtype=jnp.float32):
    """Pure-JAX reference mirroring the kernel math (optional reduced-precision
    dot operands, f32 accumulation, f32 bias/ReLU)."""
    def lin(x, w, b):
        return jnp.dot(x.astype(op_dtype), w.astype(op_dtype),
                       preferred_element_type=jnp.float32) + b
    h1 = jnp.maximum(lin(state, w1, b1), 0.0)
    h2 = jnp.maximum(lin(h1, w2, b2), 0.0)
    return lin(h2, w3, b3)


if __name__ == "__main__":
    input_dim, hidden_dim1, hidden_dim2, n_actions = 16, 32, 32, 4

    key = jax.random.PRNGKey(0)
    k_x, k_w1, k_b1, k_w2, k_b2, k_w3, k_b3 = jax.random.split(key, 7)

    # Deterministic init mimicking nn.Linear's U(-1/sqrt(fan_in), 1/sqrt(fan_in)).
    def linear_init(kw, kb, fan_in, fan_out):
        bound = fan_in ** -0.5
        w = jax.random.uniform(kw, (fan_in, fan_out), jnp.float32, -bound, bound)
        b = jax.random.uniform(kb, (fan_out,), jnp.float32, -bound, bound)
        return w, b

    w1, b1 = linear_init(k_w1, k_b1, input_dim, hidden_dim1)
    w2, b2 = linear_init(k_w2, k_b2, hidden_dim1, hidden_dim2)
    w3, b3 = linear_init(k_w3, k_b3, hidden_dim2, n_actions)

    # batch=8: single full-batch block.  batch=300: 2 "parallel" grid steps
    # with a partial edge block (exercises the no-padding path).
    for batch in (8, 300):
        state = jax.random.normal(k_x, (batch, input_dim), dtype=jnp.float32)

        out = ff_bellman_values(state, w1, b1, w2, b2, w3, b3)
        out = jax.block_until_ready(out)
        assert out.shape == (batch, n_actions)

        # Strict check against a reference using the same bf16-operand /
        # f32-accumulation math as the kernel.
        ref_bf16 = _reference(state, w1, b1, w2, b2, w3, b3,
                              op_dtype=jnp.bfloat16)
        assert jnp.allclose(out, ref_bf16, atol=1e-4, rtol=1e-4), \
            f"kernel mismatch vs bf16 reference (batch={batch})"

        # Loose sanity check against the full-f32 reference.
        ref_f32 = _reference(state, w1, b1, w2, b2, w3, b3)
        assert jnp.allclose(out, ref_f32, atol=1e-1, rtol=1e-1), \
            f"kernel mismatch vs f32 reference (batch={batch})"

    print("KERNEL_OK")
</pallas_src>

<mosaic_0001>
module attributes {stable_mosaic.version = 11 : i64} {
  func.func @_ff_bellman_kernel(%arg0: i32, %arg1: memref<8x16xf32, #tpu.memory_space<vmem>>, %arg2: memref<32x16xbf16, #tpu.memory_space<vmem>>, %arg3: memref<32x1xf32, #tpu.memory_space<vmem>>, %arg4: memref<32x32xbf16, #tpu.memory_space<vmem>>, %arg5: memref<32x1xf32, #tpu.memory_space<vmem>>, %arg6: memref<4x32xbf16, #tpu.memory_space<vmem>>, %arg7: memref<4x1xf32, #tpu.memory_space<vmem>>, %arg8: memref<4x8xf32, #tpu.memory_space<vmem>>) attributes {dimension_semantics = [#tpu.dimension_semantics<parallel>], iteration_bounds = array<i64: 1>, scalar_prefetch = 0 : i64, scratch_operands = 0 : i64, tpu.core_type = #tpu.core_type<tc>, window_params = [{transform_indices = @transform_0, window_bounds = array<i64: 8, 16>}, {pipeline_mode = #tpu.pipeline_mode<synchronous>, transform_indices = @transform_1, window_bounds = array<i64: 32, 16>}, {pipeline_mode = #tpu.pipeline_mode<synchronous>, transform_indices = @transform_2, window_bounds = array<i64: 32, 1>}, {pipeline_mode = #tpu.pipeline_mode<synchronous>, transform_indices = @transform_3, window_bounds = array<i64: 32, 32>}, {pipeline_mode = #tpu.pipeline_mode<synchronous>, transform_indices = @transform_4, window_bounds = array<i64: 32, 1>}, {pipeline_mode = #tpu.pipeline_mode<synchronous>, transform_indices = @transform_5, window_bounds = array<i64: 4, 32>}, {pipeline_mode = #tpu.pipeline_mode<synchronous>, transform_indices = @transform_6, window_bounds = array<i64: 4, 1>}, {transform_indices = @transform_7, window_bounds = array<i64: 4, 8>}]} {
    %c0 = arith.constant 0 : index
    %c0_0 = arith.constant 0 : index
    %0 = vector.load %arg1[%c0, %c0_0] : memref<8x16xf32, #tpu.memory_space<vmem>>, vector<8x16xf32>
    %c0_1 = arith.constant 0 : index
    %c0_2 = arith.constant 0 : index
    %1 = vector.load %arg3[%c0_1, %c0_2] : memref<32x1xf32, #tpu.memory_space<vmem>>, vector<32x1xf32>
    %c0_3 = arith.constant 0 : index
    %c0_4 = arith.constant 0 : index
    %2 = vector.load %arg5[%c0_3, %c0_4] : memref<32x1xf32, #tpu.memory_space<vmem>>, vector<32x1xf32>
    %c0_5 = arith.constant 0 : index
    %c0_6 = arith.constant 0 : index
    %3 = vector.load %arg7[%c0_5, %c0_6] : memref<4x1xf32, #tpu.memory_space<vmem>>, vector<4x1xf32>
    %c0_7 = arith.constant 0 : index
    %c0_8 = arith.constant 0 : index
    %4 = vector.load %arg2[%c0_7, %c0_8] : memref<32x16xbf16, #tpu.memory_space<vmem>>, vector<32x16xbf16>
    %5 = arith.truncf %0 : vector<8x16xf32> to vector<8x16xbf16>
    %cst = arith.constant dense<0.000000e+00> : vector<32x8xf32>
    %6 = tpu.matmul %4, %5, %cst {dimension_numbers = #tpu.dot_dimension_numbers<[1], [1], [0], [0], [0, 0, 1, 0], [], []>} : vector<32x16xbf16>, vector<8x16xbf16>, vector<32x8xf32> -> vector<32x8xf32>
    %7 = vector.broadcast %1 : vector<32x1xf32> to vector<32x8xf32>
    %8 = arith.addf %6, %7 : vector<32x8xf32>
    %cst_9 = arith.constant 0.000000e+00 : f32
    %9 = vector.broadcast %cst_9 : f32 to vector<32x8xf32>
    %10 = arith.maximumf %8, %9 : vector<32x8xf32>
    %c0_10 = arith.constant 0 : index
    %c0_11 = arith.constant 0 : index
    %11 = vector.load %arg4[%c0_10, %c0_11] : memref<32x32xbf16, #tpu.memory_space<vmem>>, vector<32x32xbf16>
    %12 = arith.truncf %10 : vector<32x8xf32> to vector<32x8xbf16>
    %cst_12 = arith.constant dense<0.000000e+00> : vector<32x8xf32>
    %13 = tpu.matmul %11, %12, %cst_12 {dimension_numbers = #tpu.dot_dimension_numbers<[1], [0], [0], [1], [0, 0, 1, 1], [], []>} : vector<32x32xbf16>, vector<32x8xbf16>, vector<32x8xf32> -> vector<32x8xf32>
    %14 = vector.broadcast %2 : vector<32x1xf32> to vector<32x8xf32>
    %15 = arith.addf %13, %14 : vector<32x8xf32>
    %cst_13 = arith.constant 0.000000e+00 : f32
    %16 = vector.broadcast %cst_13 : f32 to vector<32x8xf32>
    %17 = arith.maximumf %15, %16 : vector<32x8xf32>
    %c0_14 = arith.constant 0 : index
    %c0_15 = arith.constant 0 : index
    %18 = vector.load %arg6[%c0_14, %c0_15] : memref<4x32xbf16, #tpu.memory_space<vmem>>, vector<4x32xbf16>
    %19 = arith.truncf %17 : vector<32x8xf32> to vector<32x8xbf16>
    %cst_16 = arith.constant dense<0.000000e+00> : vector<4x8xf32>
    %20 = tpu.matmul %18, %19, %cst_16 {dimension_numbers = #tpu.dot_dimension_numbers<[1], [0], [0], [1], [0, 0, 1, 1], [], []>} : vector<4x32xbf16>, vector<32x8xbf16>, vector<4x8xf32> -> vector<4x8xf32>
    %21 = vector.broadcast %3 : vector<4x1xf32> to vector<4x8xf32>
    %22 = arith.addf %20, %21 : vector<4x8xf32>
    %c0_17 = arith.constant 0 : index
    %c0_18 = arith.constant 0 : index
    %23 = vector.load %arg8[%c0_17, %c0_18] : memref<4x8xf32, #tpu.memory_space<vmem>>, vector<4x8xf32>
    tpu.vector_store %arg8[%c0_17, %c0_18], %22 {strides = array<i32>} : memref<4x8xf32, #tpu.memory_space<vmem>>, vector<4x8xf32>,
    return
  }
  func.func @transform_0(%arg0: i32) -> (i32, i32) {
    %c0_i32 = arith.constant 0 : i32
    %c0_i32_0 = arith.constant 0 : i32
    return %arg0, %c0_i32 : i32, i32
  }
  func.func @transform_1(%arg0: i32) -> (i32, i32) {
    %c0_i32 = arith.constant 0 : i32
    %c0_i32_0 = arith.constant 0 : i32
    %c0_i32_1 = arith.constant 0 : i32
    return %c0_i32, %c0_i32_0 : i32, i32
  }
  func.func @transform_2(%arg0: i32) -> (i32, i32) {
    %c0_i32 = arith.constant 0 : i32
    %c0_i32_0 = arith.constant 0 : i32
    %c0_i32_1 = arith.constant 0 : i32
    return %c0_i32, %c0_i32_0 : i32, i32
  }
  func.func @transform_3(%arg0: i32) -> (i32, i32) {
    %c0_i32 = arith.constant 0 : i32
    %c0_i32_0 = arith.constant 0 : i32
    %c0_i32_1 = arith.constant 0 : i32
    return %c0_i32, %c0_i32_0 : i32, i32
  }
  func.func @transform_4(%arg0: i32) -> (i32, i32) {
    %c0_i32 = arith.constant 0 : i32
    %c0_i32_0 = arith.constant 0 : i32
    %c0_i32_1 = arith.constant 0 : i32
    return %c0_i32, %c0_i32_0 : i32, i32
  }
  func.func @transform_5(%arg0: i32) -> (i32, i32) {
    %c0_i32 = arith.constant 0 : i32
    %c0_i32_0 = arith.constant 0 : i32
    %c0_i32_1 = arith.constant 0 : i32
    return %c0_i32, %c0_i32_0 : i32, i32
  }
  func.func @transform_6(%arg0: i32) -> (i32, i32) {
    %c0_i32 = arith.constant 0 : i32
    %c0_i32_0 = arith.constant 0 : i32
    %c0_i32_1 = arith.constant 0 : i32
    return %c0_i32, %c0_i32_0 : i32, i32
  }
  func.func @transform_7(%arg0: i32) -> (i32, i32) {
    %c0_i32 = arith.constant 0 : i32
    %c0_i32_0 = arith.constant 0 : i32
    return %c0_i32, %arg0 : i32, i32
  }
}

</mosaic_0001>

<llo_original>
// kernel: tpu_custom_call.1
$region0: #{tpu_custom_call.1}
  #allocation0 [shape = 'u32[]', space=smem, size = 0x4, offset = 0x4, fixed_abs, tag = 'smem constant byte address 0x4 - core index']
  #allocation1 [shape = 'u32[72,128]{1,0:T(1,128)}', space=vmem, size = 0x9000, scoped, tag = 'internal scratch']
  %s0 = inlined_call_operand.vmem [shape: f32[8,16], index: 0, kind: input, shape index: {}]
  %s1 = inlined_call_operand.vmem [shape: bf16[32,16], index: 1, kind: input, shape index: {}]
  %s2 = inlined_call_operand.vmem [shape: f32[32,1], index: 2, kind: input, shape index: {}]
  %s3 = inlined_call_operand.vmem [shape: bf16[32,32], index: 3, kind: input, shape index: {}]
  %s4 = inlined_call_operand.vmem [shape: f32[32,1], index: 4, kind: input, shape index: {}]
  %s5 = inlined_call_operand.vmem [shape: bf16[4,32], index: 5, kind: input, shape index: {}]
  %s6 = inlined_call_operand.vmem [shape: f32[4,1], index: 6, kind: input, shape index: {}]
  %s7 = inlined_call_operand.hbm [shape: f32[4,8], index: 7, kind: output, shape index: {}]
  %s8 = sld [smem:[#allocation0]]
  $region38: #{tpu_custom_call.1} parent=0
    _
  %s10 = ssub.s32 1, %s8
  %s11 = scalar_select 0, %s10, %s8
  $region1: #{tpu_custom_call.1} parent=0
    #allocation2 [shape = 'u8[2048]{0}', space=vmem, size = 0x800, scoped, tag = 'output window, operand 0, single buffered']
    #allocation3 [shape = 's32[1]{0}', space=sflag, size = 0x4, scoped, tag = 'scoped memory for tpu_custom_call.1']
    %12 = vsyncpa [#allocation3], 0
    // Predicated region
    $region2: #{tpu_custom_call.1} parent=1 // pred_check
      _
    $region3: #{tpu_custom_call.1} parent=1 // pred_check_branch
      %14 = sbr.rel (0) target = $region5
    $region4: #{tpu_custom_call.1} parent=1 // pred_region
      _
    $region5: #{tpu_custom_call.1} parent=1 // pred_fallthru
      _
    // Predicated region
    $region6: #{tpu_custom_call.1} parent=1 // pred_check
      _
    $region7: #{tpu_custom_call.1} parent=1 // pred_check_branch
      %16 = sbr.rel (0) target = $region9
    $region8: #{tpu_custom_call.1} parent=1 // pred_region
      _
    $region9: #{tpu_custom_call.1} parent=1 // pred_fallthru
      _
    // Predicated region
    $region10: #{tpu_custom_call.1} parent=1 // pred_check
      _
    $region11: #{tpu_custom_call.1} parent=1 // pred_check_branch
      %18 = sbr.rel (0) target = $region13
    $region12: #{tpu_custom_call.1} parent=1 // pred_region
      _
    $region13: #{tpu_custom_call.1} parent=1 // pred_fallthru
      _
    // Predicated region
    $region14: #{tpu_custom_call.1} parent=1 // pred_check
      _
    $region15: #{tpu_custom_call.1} parent=1 // pred_check_branch
      %20 = sbr.rel (0) target = $region17
    $region16: #{tpu_custom_call.1} parent=1 // pred_region
      _
    $region17: #{tpu_custom_call.1} parent=1 // pred_fallthru
      _
    // Predicated region
    $region18: #{tpu_custom_call.1} parent=1 // pred_check
      _
    $region19: #{tpu_custom_call.1} parent=1 // pred_check_branch
      %22 = sbr.rel (0) target = $region21
    $region20: #{tpu_custom_call.1} parent=1 // pred_region
      _
    $region21: #{tpu_custom_call.1} parent=1 // pred_fallthru
      _
    // Predicated region
    $region22: #{tpu_custom_call.1} parent=1 // pred_check
      _
    $region23: #{tpu_custom_call.1} parent=1 // pred_check_branch
      %24 = sbr.rel (0) target = $region25
    $region24: #{tpu_custom_call.1} parent=1 // pred_region
      _
    $region25: #{tpu_custom_call.1} parent=1 // pred_fallthru
      _
    // Predicated region
    $region26: #{tpu_custom_call.1} parent=1 // pred_check
      _
    $region27: #{tpu_custom_call.1} parent=1 // pred_check_branch
      %26 = sbr.rel (0) target = $region29
    $region28: #{tpu_custom_call.1} parent=1 // pred_region
      _
    $region29: #{tpu_custom_call.1} parent=1 // pred_fallthru
      _
    %v28 = vld [vmem:[%s0] sm:$0xff]
    %v29 = vld [vmem:[%s2] sm:$0xff]
    %v30 = vld [vmem:[%s2 + $0x8] sm:$0xff]
    %v31 = vld [vmem:[%s2 + $0x10] sm:$0xff]
    %v32 = vld [vmem:[%s2 + $0x18] sm:$0xff]
    %v33 = vld [vmem:[%s4] sm:$0xff]
    %v34 = vld [vmem:[%s4 + $0x8] sm:$0xff]
    %v35 = vld [vmem:[%s4 + $0x10] sm:$0xff]
    %v36 = vld [vmem:[%s4 + $0x18] sm:$0xff]
    %v37 = vld [vmem:[%s6] sm:$0xf]
    %v38 = vld [vmem:[%s1] sm:$0xf]
    %v39 = vld [vmem:[%s1 + $0x4] sm:$0xf]
    %v40 = vld [vmem:[%s1 + $0x8] sm:$0xf]
    %v41 = vld [vmem:[%s1 + $0xc] sm:$0xf]
    %v42 = vpack.c.bf16 %v28, %v28
    %44 = vset.pattern.permute.xlu0 0
    %45 = vperm.xlu0 %44, %v29
    %v46 = vpop.permute.xlu0 %45
    %49 = vset.pattern.permute.xlu0 0
    %50 = vperm.xlu0 %49, %v30
    %v51 = vpop.permute.xlu0 %50
    %54 = vset.pattern.permute.xlu0 0
    %55 = vperm.xlu0 %54, %v31
    %v56 = vpop.permute.xlu0 %55
    %59 = vset.pattern.permute.xlu0 0
    %60 = vperm.xlu0 %59, %v32
    %v61 = vpop.permute.xlu0 %60
    %v67 = vunpack.c.l.b16 %v38
    %v68 = vunpack.c.l.b16 %v39
    %v69 = vunpack.c.l.b16 %v40
    %v70 = vunpack.c.l.b16 %v41
    %v71 = vpack.c.b16 %v68, %v67
    %v72 = vpack.c.b16 %v70, %v69
    %vm73 = vcmask 130048
    %v75 = vsel %vm73, %v71, 0
    %v78 = vsel %vm73, %v72, 0
    %v81 = vsel %vm73, %v42, 0
    %83 = vmatpush.bf16.xpose.msra.mxu0 0
    %84 = vmatpush.bf16.xpose.msra.mxu0 0
    %85 = vmatpush.bf16.xpose.msra.mxu0 0
    %86 = vmatpush.bf16.xpose.msra.mxu0 0
    %87 = vmatpush.bf16.xpose.msra.mxu0 0
    %88 = vmatpush.bf16.xpose.msra.mxu0 0
    %89 = vmatpush.bf16.xpose.msra.mxu0 0
    %90 = vmatpush.bf16.xpose.msra.mxu0 %v81
    %91 = vmatmul.bf16.gmra.mxu0 %v75
    %v92 = vpop.f32.mrf.mxu0
    %v93 = vadd.f32 %v46, %v92
    %v94 = vpop.f32.mrf.mxu0
    %v95 = vadd.f32 %v51, %v94
    %96 = vmatmul.bf16.gmra.mxu0 %v78
    %v97 = vpop.f32.mrf.mxu0
    %v98 = vadd.f32 %v56, %v97
    %v99 = vpop.f32.mrf.mxu0
    %v100 = vadd.f32 %v61, %v99
    %101 = vdwg.mxu0
    %v102 = vmax.f32 %v93, 0.0
    %v103 = vmax.f32 %v95, 0.0
    %v104 = vmax.f32 %v98, 0.0
    %v105 = vmax.f32 %v100, 0.0
    %v106 = vld [vmem:[%s3] sm:$0xf]
    %v107 = vld [vmem:[%s3 + $0x4] sm:$0xf]
    %v108 = vld [vmem:[%s3 + $0x8] sm:$0xf]
    %v109 = vld [vmem:[%s3 + $0xc] sm:$0xf]
    %v110 = vpack.c.bf16 %v103, %v102
    %v111 = vpack.c.bf16 %v105, %v104
    %113 = vset.pattern.permute.xlu0 0
    %114 = vperm.xlu0 %113, %v33
    %v115 = vpop.permute.xlu0 %114
    %118 = vset.pattern.permute.xlu0 0
    %119 = vperm.xlu0 %118, %v34
    %v120 = vpop.permute.xlu0 %119
    %123 = vset.pattern.permute.xlu0 0
    %124 = vperm.xlu0 %123, %v35
    %v125 = vpop.permute.xlu0 %124
    %128 = vset.pattern.permute.xlu0 0
    %129 = vperm.xlu0 %128, %v36
    %v130 = vpop.permute.xlu0 %129
    %v136 = vunpack.c.l.b16 %v106
    %v137 = vunpack.c.l.b16 %v107
    %v138 = vunpack.c.l.b16 %v108
    %v139 = vunpack.c.l.b16 %v109
    %v140 = vpack.c.b16 %v137, %v136
    %v141 = vpack.c.b16 %v139, %v138
    %vm142 = vcmask 261120
    %v144 = vsel %vm142, %v140, 0
    %v147 = vsel %vm142, %v141, 0
    %149 = vmatpush.bf16.msra.mxu0 0
    %150 = vmatpush.bf16.msra.mxu0 0
    %151 = vmatpush.bf16.msra.mxu0 0
    %152 = vmatpush.bf16.msra.mxu0 0
    %153 = vmatpush.bf16.msra.mxu0 0
    %154 = vmatpush.bf16.msra.mxu0 0
    %155 = vmatpush.bf16.msra.mxu0 %v111
    %156 = vmatpush.bf16.msra.mxu0 %v110
    %157 = vmatmul.bf16.gmra.mxu0 %v144
    %v158 = vpop.f32.mrf.mxu0
    %v159 = vadd.f32 %v115, %v158
    %v160 = vpop.f32.mrf.mxu0
    %v161 = vadd.f32 %v120, %v160
    %162 = vmatmul.bf16.gmra.mxu0 %v147
    %v163 = vpop.f32.mrf.mxu0
    %v164 = vadd.f32 %v125, %v163
    %v165 = vpop.f32.mrf.mxu0
    %v166 = vadd.f32 %v130, %v165
    %167 = vdwg.mxu0
    %v168 = vmax.f32 %v159, 0.0
    %v169 = vmax.f32 %v161, 0.0
    %v170 = vmax.f32 %v164, 0.0
    %v171 = vmax.f32 %v166, 0.0
    %v172 = vld [vmem:[%s5] sm:$0x3]
    %v173 = vpack.c.bf16 %v169, %v168
    %v174 = vpack.c.bf16 %v171, %v170
    %176 = vset.pattern.permute.xlu0 0
    %177 = vperm.xlu0 %176, %v37
    %v178 = vpop.permute.xlu0 %177
    %v181 = vsel %vm142, %v172, 0
    %183 = vmatpush.bf16.msra.mxu0 0
    %184 = vmatpush.bf16.msra.mxu0 0
    %185 = vmatpush.bf16.msra.mxu0 0
    %186 = vmatpush.bf16.msra.mxu0 0
    %187 = vmatpush.bf16.msra.mxu0 0
    %188 = vmatpush.bf16.msra.mxu0 0
    %189 = vmatpush.bf16.msra.mxu0 %v174
    %190 = vmatpush.bf16.msra.mxu0 %v173
    %191 = vmatmul.bf16.gmra.mxu0 %v181
    %v192 = vpop.f32.mrf.mxu0
    %v193 = vadd.f32 %v178, %v192
    %v194 = vpop.f32.mrf.mxu0
    %195 = vdwg.mxu0
    %vm196 = vcmask 60416
    %197 = vst.msk [vmem:[#allocation2] sm:$0xf] %vm196, %v193
    // Predicated region
    $region30: #{tpu_custom_call.1} parent=1 // pred_check
      _
    $region31: #{tpu_custom_call.1} parent=1 // pred_check_branch
      %199 = sbr.rel (0) target = $region33
    $region32: #{tpu_custom_call.1} parent=1 // pred_region
      %201 = vsyncadd [#allocation3], 0
      %s203 = sshll.u32 [#allocation2], 4
      %s204 = int_to_ptr.vmem [resolvable:$true] %s203
      %s205 = sshll.u32 %s7, 4
      %s206 = int_to_ptr.hbm [resolvable:$true] %s205
      %208 = dma.vmem_to_hbm [thread:$0]  %s204, 64, %s206, [#allocation3]
    $region33: #{tpu_custom_call.1} parent=1 // pred_fallthru
      _
    // Predicated region
    $region34: #{tpu_custom_call.1} parent=1 // pred_check
      _
    $region35: #{tpu_custom_call.1} parent=1 // pred_check_branch
      %210 = sbr.rel (0) target = $region37
    $region36: #{tpu_custom_call.1} parent=1 // pred_region
      %212 = dma.done [#allocation3], 64
    $region37: #{tpu_custom_call.1} parent=1 // pred_fallthru
      _
    %213 = vsyncpa [#allocation3], 1

</llo_original>
